<compile_context>
chip_gen: v5e
topology: v5e:2x2
jax: 0.10.0
libtpu: 0.0.40
codegen_flags: <defaults>
</compile_context>

<pallas_src>
import functools

import jax
import jax.numpy as jnp
import numpy as np
from jax.experimental import pallas as pl
from jax.experimental.pallas import tpu as pltpu


def _round_up(x: int, m: int) -> int:
    return ((x + m - 1) // m) * m


def _pcc_kernel(emb_ref, cent_t_ref, usq_ref, out_ref, *,
                inv_alpha: float, matmul_dtype):
    # emb_ref:    (TN, D)   row tile of embeddings (input dtype)
    # cent_t_ref: (D,  Cp)  loop-invariant centroid, pre-scaled by 2/alpha, matmul dtype
    # usq_ref:    (1,  Cp)  ||u||^2 / alpha, padded columns poisoned with 1e30
    # out_ref:    (TN, C)   normalized soft assignments (un-padded C)
    zt = emb_ref[...]                                         # single load of the tile
    z = zt.astype(jnp.float32)

    z_sq = jnp.sum(z * z, axis=1, keepdims=True)              # (TN, 1) f32
    if inv_alpha != 1.0:
        z_sq = z_sq * inv_alpha

    # MXU cross term: (TN, D) @ (D, Cp), bf16 (or f32) operands, f32 accumulation.
    # cent_t is already scaled by 2/alpha, so no per-tile constant multiplies.
    cross = jnp.dot(zt.astype(matmul_dtype), cent_t_ref[...],
                    preferred_element_type=jnp.float32)       # (TN, Cp)

    # dist^2/alpha = z_sq' + u_sq' - cross'; clamp fp negatives.
    s = jnp.maximum(z_sq + usq_ref[...] - cross, 0.0)         # (TN, Cp)

    # qij = 1 / (1 + dist^2/alpha) via the EUP approx reciprocal (full tile).
    qij = pl.reciprocal(1.0 + s, approx=True)                 # padded cols ~ 0

    denom = jnp.sum(qij, axis=1, keepdims=True)               # (TN, 1)
    inv_denom = 1.0 / denom                                   # exact: rows sum to 1

    c = out_ref.shape[1]
    out_ref[...] = (qij[:, :c] * inv_denom).astype(out_ref.dtype)


def pcc_layer(emb: jax.Array, centroid: jax.Array, alpha: float = 1.0,
              *, block_n: int = 1024, matmul_dtype=jnp.bfloat16) -> jax.Array:
    """Pallas implementation of PCC_Layer.forward.

    emb:      (N, D) float array (any float dtype; cast in-kernel)
    centroid: (C, D) float array
    returns:  (N, C) float32 normalized soft assignments
    """
    n, d = emb.shape
    c, d2 = centroid.shape
    assert d == d2, "embedding dim mismatch"
    inv_alpha = float(1.0 / alpha)

    # Internal compute width: pad C to a multiple of 128 (lane-dense / MXU).
    c_pad = _round_up(max(c, 1), 128)

    # Row tile: multiple of 8; clamp so the grid has >= 2 steps for moderate N
    # (lets v7x shard the single "parallel" axis across its 2 TensorCores).
    bn_cap = max(8, _round_up(pl.cdiv(n, 2), 8))
    bn = max(8, (min(block_n, bn_cap) // 8) * 8)
    grid = (pl.cdiv(n, bn),)

    # ---- Tiny wrapper-side prep on the (C, D) centroid only (emb untouched) ----
    cent_f32 = centroid.astype(jnp.float32)
    # cross operand: (D, Cp), pre-scaled by 2/alpha, matmul dtype, zero-padded cols.
    cent_t = (cent_f32 * (2.0 * inv_alpha)).T.astype(matmul_dtype)   # (D, C)
    if c_pad != c:
        cent_t = jnp.pad(cent_t, ((0, 0), (0, c_pad - c)))
    # ||u||^2 / alpha, padded cols poisoned so qij of padded columns ~ 0.
    u_sq = (jnp.sum(cent_f32 * cent_f32, axis=1) * inv_alpha)[None, :]  # (1, C)
    if c_pad != c:
        u_sq = jnp.pad(u_sq, ((0, 0), (0, c_pad - c)), constant_values=1e30)

    # ---- VMEM budget from the actual tile footprint (generation-aware cap) ----
    in_bytes = jnp.dtype(emb.dtype).itemsize
    mm_bytes = jnp.dtype(matmul_dtype).itemsize
    est = (2 * bn * d * in_bytes          # double-buffered embedding tile
           + d * c_pad * mm_bytes         # resident centroid (loop-invariant)
           + c_pad * 4                    # ||u||^2 row
           + 2 * bn * c * 4               # double-buffered output tile
           + 4 * bn * c_pad * 4)          # f32 temporaries (cross / s / qij)
    try:
        cap = (3 * int(pltpu.get_tpu_info().vmem_capacity_bytes)) // 4
    except Exception:
        cap = 48 << 20                    # safe on v7x (64 MiB physical) too
    vmem_limit = int(min(cap, max(16 << 20, 2 * est)))

    out = pl.pallas_call(
        functools.partial(_pcc_kernel,
                          inv_alpha=inv_alpha,
                          matmul_dtype=matmul_dtype),
        out_shape=jax.ShapeDtypeStruct((n, c), jnp.float32),
        grid_spec=pltpu.PrefetchScalarGridSpec(
            num_scalar_prefetch=0,
            grid=grid,
            in_specs=[
                pl.BlockSpec((bn, d), lambda i: (i, 0)),        # emb row tile
                pl.BlockSpec((d, c_pad), lambda i: (0, 0)),     # resident centroid^T
                pl.BlockSpec((1, c_pad), lambda i: (0, 0)),     # hoisted ||u||^2/alpha
            ],
            out_specs=pl.BlockSpec((bn, c), lambda i: (i, 0)),  # un-padded C output
        ),
        compiler_params=pltpu.CompilerParams(
            dimension_semantics=("parallel",),
            vmem_limit_bytes=vmem_limit,
        ),
    )(emb, cent_t, u_sq)

    return out


def _pcc_reference(emb, centroid, alpha=1.0):
    # Pure-JAX reference mirroring the PyTorch code exactly (f32 path).
    z = emb[:, None, :].astype(jnp.float32)                # (N, 1, D)
    u = centroid[None, :, :].astype(jnp.float32)           # (1, C, D)
    qij = 1.0 / (1.0 + jnp.sum((z - u) ** 2, axis=2) / alpha)
    return (qij.T / jnp.sum(qij, axis=1)).T


if __name__ == "__main__":
    key = jax.random.PRNGKey(0)
    k1, k2, k3, k4 = jax.random.split(key, 4)

    # Tolerances loosened vs pure-f32: the cross term runs in bf16 on the MXU
    # and the per-element reciprocal uses the approx EUP path.
    RTOL = ATOL = 2e-2

    # Case 1: small shapes matching the module's typical use (N=8, D=32, C=4).
    N, D, C = 8, 32, 4
    alpha = 1.0
    emb = jax.random.normal(k1, (N, D), dtype=jnp.float32)
    centroid = jax.random.normal(k2, (C, D), dtype=jnp.float32)

    out = jax.block_until_ready(pcc_layer(emb, centroid, alpha=alpha))
    ref = jax.block_until_ready(_pcc_reference(emb, centroid, alpha=alpha))
    np.testing.assert_allclose(np.asarray(out), np.asarray(ref), rtol=RTOL, atol=ATOL)
    np.testing.assert_allclose(np.asarray(out).sum(axis=1),
                               np.ones(N, dtype=np.float32), rtol=1e-5, atol=1e-5)

    # Case 2: ragged N / C to exercise the multi-tile + masked-last-block path.
    N2, D2, C2 = 300, 64, 10
    emb2 = jax.random.normal(k3, (N2, D2), dtype=jnp.float32)
    centroid2 = jax.random.normal(k4, (C2, D2), dtype=jnp.float32)

    out2 = jax.block_until_ready(pcc_layer(emb2, centroid2, alpha=2.0, block_n=128))
    ref2 = jax.block_until_ready(_pcc_reference(emb2, centroid2, alpha=2.0))
    np.testing.assert_allclose(np.asarray(out2), np.asarray(ref2), rtol=RTOL, atol=ATOL)
    np.testing.assert_allclose(np.asarray(out2).sum(axis=1),
                               np.ones(N2, dtype=np.float32), rtol=1e-5, atol=1e-5)

    print("KERNEL_OK")
</pallas_src>

<mosaic_0001>
module attributes {stable_mosaic.version = 11 : i64} {
  func.func @_pcc_kernel(%arg0: i32, %arg1: memref<8x32xf32, #tpu.memory_space<vmem>>, %arg2: memref<32x128xbf16, #tpu.memory_space<vmem>>, %arg3: memref<1x128xf32, #tpu.memory_space<vmem>>, %arg4: memref<8x4xf32, #tpu.memory_space<vmem>>) attributes {dimension_semantics = [#tpu.dimension_semantics<parallel>], iteration_bounds = array<i64: 1>, scalar_prefetch = 0 : i64, scratch_operands = 0 : i64, tpu.core_type = #tpu.core_type<tc>, window_params = [{transform_indices = @transform_0, window_bounds = array<i64: 8, 32>}, {pipeline_mode = #tpu.pipeline_mode<synchronous>, transform_indices = @transform_1, window_bounds = array<i64: 32, 128>}, {pipeline_mode = #tpu.pipeline_mode<synchronous>, transform_indices = @transform_2, window_bounds = array<i64: 1, 128>}, {transform_indices = @transform_3, window_bounds = array<i64: 8, 4>}]} {
    %c0 = arith.constant 0 : index
    %c0_0 = arith.constant 0 : index
    %0 = vector.load %arg1[%c0, %c0_0] : memref<8x32xf32, #tpu.memory_space<vmem>>, vector<8x32xf32>
    %1 = arith.mulf %0, %0 : vector<8x32xf32>
    %cst = arith.constant dense<0.000000e+00> : vector<8xf32>
    %2 = vector.multi_reduction <add>, %1, %cst [1] : vector<8x32xf32> to vector<8xf32>
    %3 = vector.shape_cast %2 : vector<8xf32> to vector<8x1xf32>
    %4 = arith.truncf %0 : vector<8x32xf32> to vector<8x32xbf16>
    %c0_1 = arith.constant 0 : index
    %c0_2 = arith.constant 0 : index
    %5 = vector.load %arg2[%c0_1, %c0_2] : memref<32x128xbf16, #tpu.memory_space<vmem>>, vector<32x128xbf16>
    %cst_3 = arith.constant dense<0.000000e+00> : vector<8x128xf32>
    %6 = tpu.matmul %4, %5, %cst_3 {dimension_numbers = #tpu.dot_dimension_numbers<[1], [0], [0], [1], [0, 0, 1, 1], [], []>} : vector<8x32xbf16>, vector<32x128xbf16>, vector<8x128xf32> -> vector<8x128xf32>
    %c0_4 = arith.constant 0 : index
    %c0_5 = arith.constant 0 : index
    %7 = vector.load %arg3[%c0_4, %c0_5] : memref<1x128xf32, #tpu.memory_space<vmem>>, vector<1x128xf32>
    %8 = vector.broadcast %3 : vector<8x1xf32> to vector<8x128xf32>
    %9 = vector.broadcast %7 : vector<1x128xf32> to vector<8x128xf32>
    %10 = arith.addf %8, %9 : vector<8x128xf32>
    %11 = arith.subf %10, %6 : vector<8x128xf32>
    %cst_6 = arith.constant 0.000000e+00 : f32
    %12 = vector.broadcast %cst_6 : f32 to vector<8x128xf32>
    %13 = arith.maximumf %11, %12 : vector<8x128xf32>
    %cst_7 = arith.constant 1.000000e+00 : f32
    %14 = vector.broadcast %cst_7 : f32 to vector<8x128xf32>
    %15 = arith.addf %14, %13 : vector<8x128xf32>
    %16 = tpu.reciprocal %15 {approx = true} : vector<8x128xf32> -> vector<8x128xf32>
    %cst_8 = arith.constant dense<0.000000e+00> : vector<8xf32>
    %17 = vector.multi_reduction <add>, %16, %cst_8 [1] : vector<8x128xf32> to vector<8xf32>
    %18 = vector.shape_cast %17 : vector<8xf32> to vector<8x1xf32>
    %cst_9 = arith.constant 1.000000e+00 : f32
    %19 = vector.broadcast %cst_9 : f32 to vector<8x1xf32>
    %20 = arith.divf %19, %18 : vector<8x1xf32>
    %21 = vector.extract_strided_slice %16 {offsets = [0, 0], sizes = [8, 4], strides = [1, 1]} : vector<8x128xf32> to vector<8x4xf32>
    %22 = vector.broadcast %20 : vector<8x1xf32> to vector<8x4xf32>
    %23 = arith.mulf %21, %22 : vector<8x4xf32>
    %c0_10 = arith.constant 0 : index
    %c0_11 = arith.constant 0 : index
    %24 = vector.load %arg4[%c0_10, %c0_11] : memref<8x4xf32, #tpu.memory_space<vmem>>, vector<8x4xf32>
    tpu.vector_store %arg4[%c0_10, %c0_11], %23 {strides = array<i32>} : memref<8x4xf32, #tpu.memory_space<vmem>>, vector<8x4xf32>,
    return
  }
  func.func @transform_0(%arg0: i32) -> (i32, i32) {
    %c0_i32 = arith.constant 0 : i32
    %c0_i32_0 = arith.constant 0 : i32
    return %arg0, %c0_i32 : i32, i32
  }
  func.func @transform_1(%arg0: i32) -> (i32, i32) {
    %c0_i32 = arith.constant 0 : i32
    %c0_i32_0 = arith.constant 0 : i32
    %c0_i32_1 = arith.constant 0 : i32
    return %c0_i32, %c0_i32_0 : i32, i32
  }
  func.func @transform_2(%arg0: i32) -> (i32, i32) {
    %c0_i32 = arith.constant 0 : i32
    %c0_i32_0 = arith.constant 0 : i32
    %c0_i32_1 = arith.constant 0 : i32
    return %c0_i32, %c0_i32_0 : i32, i32
  }
  func.func @transform_3(%arg0: i32) -> (i32, i32) {
    %c0_i32 = arith.constant 0 : i32
    %c0_i32_0 = arith.constant 0 : i32
    return %arg0, %c0_i32 : i32, i32
  }
}

</mosaic_0001>

<llo_original>
// kernel: tpu_custom_call.1
$region0: #{tpu_custom_call.1}
  #allocation0 [shape = 'u32[]', space=smem, size = 0x4, offset = 0x4, fixed_abs, tag = 'smem constant byte address 0x4 - core index']
  #allocation1 [shape = 'u32[72,128]{1,0:T(1,128)}', space=vmem, size = 0x9000, scoped, tag = 'internal scratch']
  %s0 = inlined_call_operand.hbm [shape: f32[8,32], index: 0, kind: input, shape index: {}]
  %s1 = inlined_call_operand.hbm [shape: bf16[32,128], index: 1, kind: input, shape index: {}]
  %s2 = inlined_call_operand.vmem [shape: f32[1,128], index: 2, kind: input, shape index: {}]
  %s3 = inlined_call_operand.vmem [shape: f32[8,4], index: 3, kind: output, shape index: {}]
  %s4 = sld [smem:[#allocation0]]
  $region30: #{tpu_custom_call.1} parent=0
    _
  %s6 = ssub.s32 1, %s4
  %s7 = scalar_select 0, %s6, %s4
  $region1: #{tpu_custom_call.1} parent=0
    #allocation2 [shape = 'u8[4096]{0}', space=vmem, size = 0x1000, scoped, tag = 'input window, operand 0, single buffered']
    #allocation3 [shape = 's32[1]{0}', space=sflag, size = 0x4, scoped, tag = 'scoped memory for tpu_custom_call.1']
    #allocation4 [shape = 'u8[8192]{0}', space=vmem, size = 0x2000, scoped, tag = 'input window, operand 1, single buffered']
    #allocation5 [shape = 's32[1]{0}', space=sflag, size = 0x4, scoped, tag = 'scoped memory for tpu_custom_call.1']
    %8 = vsyncpa [#allocation3], 0
    %9 = vsyncpa [#allocation5], 0
    // Predicated region
    $region2: #{tpu_custom_call.1} parent=1 // pred_check
      _
    $region3: #{tpu_custom_call.1} parent=1 // pred_check_branch
      %11 = sbr.rel (0) target = $region5
    $region4: #{tpu_custom_call.1} parent=1 // pred_region
      %13 = vsyncadd [#allocation3], 0
      %s15 = sshll.u32 %s0, 4
      %s16 = int_to_ptr.hbm [resolvable:$true] %s15
      %s17 = sshll.u32 [#allocation2], 4
      %s18 = int_to_ptr.vmem [resolvable:$true] %s17
      %20 = dma.hbm_to_vmem [thread:$0]  %s16, 128, %s18, [#allocation3]
    $region5: #{tpu_custom_call.1} parent=1 // pred_fallthru
      _
    // Predicated region
    $region6: #{tpu_custom_call.1} parent=1 // pred_check
      _
    $region7: #{tpu_custom_call.1} parent=1 // pred_check_branch
      %22 = sbr.rel (0) target = $region9
    $region8: #{tpu_custom_call.1} parent=1 // pred_region
      %24 = vsyncadd [#allocation5], 0
      %s25 = sshll.u32 %s1, 4
      %s26 = int_to_ptr.hbm [resolvable:$true] %s25
      %s27 = sshll.u32 [#allocation4], 4
      %s28 = int_to_ptr.vmem [resolvable:$true] %s27
      %33 = dma.hbm_to_vmem [thread:$0]  %s26, 256, %s28, [#allocation5], 64, 64, 4
    $region9: #{tpu_custom_call.1} parent=1 // pred_fallthru
      _
    // Predicated region
    $region10: #{tpu_custom_call.1} parent=1 // pred_check
      _
    $region11: #{tpu_custom_call.1} parent=1 // pred_check_branch
      %35 = sbr.rel (0) target = $region13
    $region12: #{tpu_custom_call.1} parent=1 // pred_region
      _
    $region13: #{tpu_custom_call.1} parent=1 // pred_fallthru
      _
    // Predicated region
    $region14: #{tpu_custom_call.1} parent=1 // pred_check
      _
    $region15: #{tpu_custom_call.1} parent=1 // pred_check_branch
      %37 = sbr.rel (0) target = $region17
    $region16: #{tpu_custom_call.1} parent=1 // pred_region
      %39 = dma.done [#allocation3], 128
    $region17: #{tpu_custom_call.1} parent=1 // pred_fallthru
      _
    // Predicated region
    $region18: #{tpu_custom_call.1} parent=1 // pred_check
      _
    $region19: #{tpu_custom_call.1} parent=1 // pred_check_branch
      %41 = sbr.rel (0) target = $region21
    $region20: #{tpu_custom_call.1} parent=1 // pred_region
      %43 = dma.done [#allocation5], 256
    $region21: #{tpu_custom_call.1} parent=1 // pred_fallthru
      _
    %v45 = vld [vmem:[#allocation2] sm:$0xff]
    %v46 = vmul.f32 %v45, %v45
    %vm47 = vcmask 261120
    %v48 = vsel %vm47, %v46, 0.0
    %49 = vadd.xlane.f32.xlu0 %v48
    %v50 = vpop.xlane.xlu0 %49
    %v51 = vpack.c.bf16 %v45, %v45
    %v52 = vld [vmem:[#allocation4] sm:$0xf]
    %v53 = vld [vmem:[#allocation4 + $0x4] sm:$0xf]
    %v54 = vld [vmem:[#allocation4 + $0x8] sm:$0xf]
    %v55 = vld [vmem:[#allocation4 + $0xc] sm:$0xf]
    %v60 = vunpack.c.l.b16 %v52
    %v61 = vunpack.c.l.b16 %v53
    %v62 = vunpack.c.l.b16 %v54
    %v63 = vunpack.c.l.b16 %v55
    %v64 = vpack.c.b16 %v61, %v60
    %v65 = vpack.c.b16 %v63, %v62
    %v69 = vsel %vm47, %v51, 0
    %71 = vmatpush.bf16.msra.mxu0 0
    %72 = vmatpush.bf16.msra.mxu0 0
    %73 = vmatpush.bf16.msra.mxu0 0
    %74 = vmatpush.bf16.msra.mxu0 0
    %75 = vmatpush.bf16.msra.mxu0 0
    %76 = vmatpush.bf16.msra.mxu0 0
    %77 = vmatpush.bf16.msra.mxu0 %v65
    %78 = vmatpush.bf16.msra.mxu0 %v64
    %79 = vmatmul.bf16.gmra.mxu0 %v69
    %v80 = vpop.f32.mrf.mxu0
    %v81 = vadd.f32 0.0, %v80
    %v82 = vpop.f32.mrf.mxu0
    %83 = vdwg.mxu0
    %v84 = vld [vmem:[%s2] sm:$0x1]
    %v86 = vperm.slane %v84, 0
    %v88 = vadd.f32 %v50, %v86
    %v89 = vsub.f32 %v88, %v81
    %v90 = vmax.f32 %v89, 0.0
    %v91 = vadd.f32 %v90, 1.0
    %v92 = vrcp.pop %v91
    %93 = vadd.xlane.f32.xlu0 %v92
    %v94 = vpop.xlane.xlu0 %93
    %v95 = vrcp.pop %v94
    %v96 = vmul.f32 %v94, %v95
    %v97 = vsub.f32 1.0, %v96
    %v98 = vmul.f32 %v95, %v97
    %v99 = vadd.f32 %v95, %v98
    %vm100 = vweird.f32 %v94
    %vm101 = vweird.f32 %v95
    %vm102 = vmor %vm100, %vm101
    %v103 = vsel %vm102, %v95, %v99
    %v104 = vand.u32 2147483647, %v94
    %vm105 = vcmp.eq.f32.partialorder %v104, 8.507059e+37
    %v106 = vand.u32 %v94, 2147483648
    %v107 = vor.u32 1.1754944e-38, %v106
    %v108 = vsel %vm105, %v107, %v103
    %v109 = vmul.f32 1.0, %v108
    %v110 = vmul.f32 %v92, %v109
    %vm111 = vcmask 31744
    %112 = vst.msk [vmem:[%s3] sm:$0xff] %vm111, %v110
    // Predicated region
    $region22: #{tpu_custom_call.1} parent=1 // pred_check
      _
    $region23: #{tpu_custom_call.1} parent=1 // pred_check_branch
      %114 = sbr.rel (0) target = $region25
    $region24: #{tpu_custom_call.1} parent=1 // pred_region
      _
    $region25: #{tpu_custom_call.1} parent=1 // pred_fallthru
      _
    // Predicated region
    $region26: #{tpu_custom_call.1} parent=1 // pred_check
      _
    $region27: #{tpu_custom_call.1} parent=1 // pred_check_branch
      %116 = sbr.rel (0) target = $region29
    $region28: #{tpu_custom_call.1} parent=1 // pred_region
      _
    $region29: #{tpu_custom_call.1} parent=1 // pred_fallthru
      _
    %117 = vsyncpa [#allocation3], 1
    %118 = vsyncpa [#allocation5], 1

</llo_original>
